<compile_context>
chip_gen: v7x
topology: tpu7x:2x2x1
jax: 0.10.0
libtpu: 0.0.40
codegen_flags: <defaults>
</compile_context>

<pallas_src>
import math
import functools

import jax
import jax.numpy as jnp
from jax import lax
from jax.experimental import pallas as pl
from jax.experimental.pallas import tpu as pltpu


def _round_up(x, m):
    return (x + m - 1) // m * m


# ------------------------------------------------------------------------
# Generation-aware sizing (v7x has 64 MiB VMEM/TC, v5e/v6e 128 MiB)
# ------------------------------------------------------------------------
def _vmem_capacity_bytes():
    try:
        return int(pltpu.get_tpu_info().vmem_capacity_bytes)
    except Exception:
        return 64 << 20     # conservative fallback (v7x per-TC VMEM)


_VMEM_CAP = _vmem_capacity_bytes()
_VMEM_LIMIT = min(_VMEM_CAP * 3 // 4, 96 << 20)
_SMALL_VMEM = _VMEM_CAP <= (64 << 20)          # v7x-class part
_TM_DEFAULT = 512 if _SMALL_VMEM else 1024     # patch-embed row tile
_TV_DEFAULT = 1024 if _SMALL_VMEM else 2048    # decoder vocab tile


# ------------------------------------------------------------------------
# Kernel 1: patch embedding (visual_encoder hot path)
#   patches : (M, Kp)  bf16     M = B * n_patches,  Kp = round_up(C*p*p, 128)
#   w       : (Kp, Dp) bf16
#   b       : (1, Dp)  f32
#   out     : (M, Dp)  bf16
# Row-tiled (cdiv grid, boundary-masked), weight/bias resident.
# ------------------------------------------------------------------------
def _patch_embed_kernel(patches_ref, w_ref, b_ref, out_ref):
    acc = jnp.dot(patches_ref[...], w_ref[...],
                  preferred_element_type=jnp.float32)
    out_ref[...] = (acc + b_ref[...]).astype(out_ref.dtype)


def patch_embed(patches, w, b, *, tm=None):
    if tm is None:
        tm = _TM_DEFAULT
    M, K = patches.shape
    _, D = w.shape
    tm = min(tm, M)
    grid_m = pl.cdiv(M, tm)          # boundary masking, no activation padding
    cost = pl.CostEstimate(
        flops=2 * M * K * D,
        transcendentals=0,
        bytes_accessed=(M * K + K * D + M * D) * 2 + D * 4,
    )
    return pl.pallas_call(
        _patch_embed_kernel,
        out_shape=jax.ShapeDtypeStruct((M, D), jnp.bfloat16),
        grid_spec=pltpu.PrefetchScalarGridSpec(
            num_scalar_prefetch=0,
            grid=(grid_m,),
            in_specs=[
                pl.BlockSpec((tm, K), lambda i: (i, 0)),   # streamed row tiles
                pl.BlockSpec((K, D), lambda i: (0, 0)),    # resident weight
                pl.BlockSpec((1, D), lambda i: (0, 0)),    # resident bias
            ],
            out_specs=pl.BlockSpec((tm, D), lambda i: (i, 0)),
        ),
        compiler_params=pltpu.CompilerParams(
            dimension_semantics=("parallel",),
            vmem_limit_bytes=_VMEM_LIMIT),
        cost_estimate=cost,
    )(patches, w, b)


# ------------------------------------------------------------------------
# Kernel 2a: per-batch single-head cross-attention (text attends to visual)
#   txt_emb : (B, T, Dp) bf16 ;  vis : (B, N, Dp) bf16
#   fused   : (B, T, Dp) bf16  = txt_emb + softmax(q k^T / sqrt(D)) vis
# grid = (B,), fully parallel (cheap relative to the vocab projection).
# ------------------------------------------------------------------------
def _cross_attn_kernel(txt_ref, vis_ref, fused_ref, *, scale):
    txt = txt_ref[0]                                     # (T, Dp) bf16
    vis = vis_ref[0]                                     # (N, Dp) bf16
    # fold 1/sqrt(D) into the query operand (cheaper than scaling scores)
    q = (txt.astype(jnp.float32) * scale).astype(jnp.bfloat16)
    # contract on the shared feature axis directly -- no vis.T relayout
    scores = lax.dot_general(
        q, vis, dimension_numbers=(((1,), (1,)), ((), ())),
        preferred_element_type=jnp.float32)              # (T, N) f32
    m = jnp.max(scores, axis=-1, keepdims=True)
    p = jnp.exp(scores - m)
    denom = jnp.sum(p, axis=-1, keepdims=True)
    attn = p * pl.reciprocal(denom, approx=True)         # EUP vrcp
    ctx = jnp.dot(attn.astype(jnp.bfloat16), vis,
                  preferred_element_type=jnp.float32)    # (T, Dp) f32
    fused_ref[0] = (txt.astype(jnp.float32) + ctx).astype(fused_ref.dtype)


def cross_attention(txt_emb, vis, *, scale):
    B, T, D = txt_emb.shape
    _, N, _ = vis.shape
    kernel = functools.partial(_cross_attn_kernel, scale=scale)
    cost = pl.CostEstimate(
        flops=4 * B * T * N * D,
        transcendentals=B * T * N,
        bytes_accessed=(2 * B * T * D + B * N * D) * 2,
    )
    return pl.pallas_call(
        kernel,
        out_shape=jax.ShapeDtypeStruct((B, T, D), jnp.bfloat16),
        grid_spec=pltpu.PrefetchScalarGridSpec(
            num_scalar_prefetch=0,
            grid=(B,),
            in_specs=[
                pl.BlockSpec((1, T, D), lambda b: (b, 0, 0)),
                pl.BlockSpec((1, N, D), lambda b: (b, 0, 0)),
            ],
            out_specs=pl.BlockSpec((1, T, D), lambda b: (b, 0, 0)),
        ),
        compiler_params=pltpu.CompilerParams(
            dimension_semantics=("parallel",),
            vmem_limit_bytes=_VMEM_LIMIT),
        cost_estimate=cost,
    )(txt_emb, vis)


# ------------------------------------------------------------------------
# Kernel 2b: vocab projection, flattened over (B*T) rows
#   x     : (M2, Dp) bf16   M2 = B*T   (resident, small)
#   w_out : (Dp, Vp) bf16   (streamed in (Dp, TV) tiles, once total)
#   out   : (M2, Vp) f32
# grid = (n_v,), "parallel" -> both TensorCores on v7x even when B == 1.
# ------------------------------------------------------------------------
def _vocab_proj_kernel(x_ref, w_ref, out_ref):
    out_ref[...] = jnp.dot(x_ref[...], w_ref[...],
                           preferred_element_type=jnp.float32)


def vocab_projection(x, w_out, *, tv=None):
    if tv is None:
        tv = _TV_DEFAULT
    M, D = x.shape
    _, Vp = w_out.shape
    tv = min(tv, Vp)
    grid_v = pl.cdiv(Vp, tv)         # boundary masking, no per-call weight pad
    cost = pl.CostEstimate(
        flops=2 * M * D * Vp,
        transcendentals=0,
        bytes_accessed=(M * D + D * Vp) * 2 + M * Vp * 4,   # w_out streams ONCE
    )
    return pl.pallas_call(
        _vocab_proj_kernel,
        out_shape=jax.ShapeDtypeStruct((M, Vp), jnp.float32),
        grid_spec=pltpu.PrefetchScalarGridSpec(
            num_scalar_prefetch=0,
            grid=(grid_v,),
            in_specs=[
                pl.BlockSpec((M, D), lambda v: (0, 0)),    # resident activations
                pl.BlockSpec((D, tv), lambda v: (0, v)),   # streamed weight tiles
            ],
            out_specs=pl.BlockSpec((M, tv), lambda v: (0, v)),
        ),
        compiler_params=pltpu.CompilerParams(
            dimension_semantics=("parallel",),
            vmem_limit_bytes=_VMEM_LIMIT),
        cost_estimate=cost,
    )(x, w_out)


# ------------------------------------------------------------------------
# Full DirectImageVLM forward
# ------------------------------------------------------------------------
class DirectImageVLMPallas:
    def __init__(self, *, in_channels, patch, hidden, vocab, key):
        self.patch = patch
        self.hidden = hidden
        self.vocab = vocab
        k_raw = in_channels * patch * patch
        # all padding hoisted to init (lane-dense 128-multiples everywhere)
        self.kp = _round_up(k_raw, 128)    # conv contraction dim
        self.dp = _round_up(hidden, 128)   # feature dim
        self.vp = _round_up(vocab, 128)    # vocab dim
        k1, k2, k3, k4 = jax.random.split(key, 4)
        w_patch = jax.random.normal(k1, (k_raw, hidden), jnp.float32) / math.sqrt(k_raw)
        b_patch = jax.random.normal(k2, (1, hidden), jnp.float32) * 0.01
        embed = jax.random.normal(k3, (vocab, hidden), jnp.float32) / math.sqrt(hidden)
        w_out = jax.random.normal(k4, (hidden, vocab), jnp.float32) / math.sqrt(hidden)
        # zero padding keeps results identical to the unpadded computation:
        # padded K rows multiply zero patch cols, padded D cols produce zero
        # features everywhere, padded vocab cols give zero logits (sliced off).
        self.w_patch = jnp.pad(w_patch, ((0, self.kp - k_raw),
                                         (0, self.dp - hidden))).astype(jnp.bfloat16)
        self.b_patch = jnp.pad(b_patch, ((0, 0), (0, self.dp - hidden)))   # f32
        self.embed = jnp.pad(embed, ((0, 0), (0, self.dp - hidden))
                             ).astype(jnp.bfloat16)
        self.w_out = jnp.pad(w_out, ((0, self.dp - hidden), (0, self.vp - vocab))
                             ).astype(jnp.bfloat16)
        self.scale = 1.0 / math.sqrt(hidden)

    def __call__(self, image, text):
        # image: (B, C, H, W) NCHW like PyTorch;  text: (B, T) int32 ids
        B, C, H, W = image.shape
        p = self.patch
        nh, nw = H // p, W // p
        k_raw = C * p * p
        # glue: NCHW -> (B*N, Kp) im2col rows; XLA fuses reshape/transpose/pad/
        # cast into one copy.
        # TODO(synk): fold this relayout into the patch-embed BlockSpec DMA
        # (Element-indexed strided patch reads from the NCHW image) to avoid
        # the extra HBM round trip of the patch matrix.
        patches = image.reshape(B, C, nh, p, nw, p)
        patches = patches.transpose(0, 2, 4, 1, 3, 5)       # (B, nh, nw, C, p, p)
        patches = patches.reshape(B * nh * nw, k_raw)
        if self.kp != k_raw:
            patches = jnp.pad(patches, ((0, 0), (0, self.kp - k_raw)))
        patches = patches.astype(jnp.bfloat16)

        vis_flat = patch_embed(patches, self.w_patch, self.b_patch)  # (B*N, Dp)
        visual_features = vis_flat.reshape(B, nh * nw, self.dp)

        # TODO(synk): network_simulator (transmission delay / packet drop +
        # time.sleep) has no Pallas equivalent; omitted.

        # TODO(synk): token-embedding gather kept as jnp.take glue; could be
        # fused via scalar-prefetched ids + Element row indexing.
        txt_emb = jnp.take(self.embed, text, axis=0)        # (B, T, Dp) bf16

        T = text.shape[1]
        fused = cross_attention(txt_emb, visual_features, scale=self.scale)
        logits2d = vocab_projection(fused.reshape(B * T, self.dp), self.w_out)
        logits = logits2d.reshape(B, T, self.vp)
        return logits[:, :, :self.vocab]                    # (B, T, V) f32


if __name__ == "__main__":
    key = jax.random.PRNGKey(0)
    k_img, k_txt, k_params = jax.random.split(key, 3)

    B, C, H, W = 2, 4, 16, 16
    T = 8          # text sequence length
    D = 32         # hidden dim
    V = 64         # vocab size
    P = 4          # patch size -> 16 visual tokens

    image = jax.random.normal(k_img, (B, C, H, W), jnp.float32)
    text = jax.random.randint(k_txt, (B, T), 0, V, jnp.int32)

    model = DirectImageVLMPallas(in_channels=C, patch=P, hidden=D,
                                 vocab=V, key=k_params)
    out = model(image, text)
    jax.block_until_ready(out)
    assert out.shape == (B, T, V), out.shape
    print("KERNEL_OK")
</pallas_src>

<mosaic_0001>
module attributes {stable_mosaic.version = 11 : i64} {
  func.func @_patch_embed_kernel(%arg0: i32, %arg1: memref<32x128xbf16, #tpu.memory_space<vmem>>, %arg2: memref<128x128xbf16, #tpu.memory_space<vmem>>, %arg3: memref<1x128xf32, #tpu.memory_space<vmem>>, %arg4: memref<32x128xbf16, #tpu.memory_space<vmem>>) attributes {dimension_semantics = [#tpu.dimension_semantics<parallel>], iteration_bounds = array<i64: 1>, scalar_prefetch = 0 : i64, scratch_operands = 0 : i64, tpu.core_type = #tpu.core_type<tc>, window_params = [{transform_indices = @transform_0, window_bounds = array<i64: 32, 128>}, {pipeline_mode = #tpu.pipeline_mode<synchronous>, transform_indices = @transform_1, window_bounds = array<i64: 128, 128>}, {pipeline_mode = #tpu.pipeline_mode<synchronous>, transform_indices = @transform_2, window_bounds = array<i64: 1, 128>}, {transform_indices = @transform_3, window_bounds = array<i64: 32, 128>}]} {
    %c0 = arith.constant 0 : index
    %c0_0 = arith.constant 0 : index
    %0 = vector.load %arg1[%c0, %c0_0] : memref<32x128xbf16, #tpu.memory_space<vmem>>, vector<32x128xbf16>
    %c0_1 = arith.constant 0 : index
    %c0_2 = arith.constant 0 : index
    %1 = vector.load %arg2[%c0_1, %c0_2] : memref<128x128xbf16, #tpu.memory_space<vmem>>, vector<128x128xbf16>
    %cst = arith.constant dense<0.000000e+00> : vector<32x128xf32>
    %2 = tpu.matmul %0, %1, %cst {dimension_numbers = #tpu.dot_dimension_numbers<[1], [0], [0], [1], [0, 0, 1, 1], [], []>} : vector<32x128xbf16>, vector<128x128xbf16>, vector<32x128xf32> -> vector<32x128xf32>
    %c0_3 = arith.constant 0 : index
    %c0_4 = arith.constant 0 : index
    %3 = vector.load %arg3[%c0_3, %c0_4] : memref<1x128xf32, #tpu.memory_space<vmem>>, vector<1x128xf32>
    %4 = vector.broadcast %3 : vector<1x128xf32> to vector<32x128xf32>
    %5 = arith.addf %2, %4 : vector<32x128xf32>
    %6 = arith.truncf %5 : vector<32x128xf32> to vector<32x128xbf16>
    %c0_5 = arith.constant 0 : index
    %c0_6 = arith.constant 0 : index
    %7 = vector.load %arg4[%c0_5, %c0_6] : memref<32x128xbf16, #tpu.memory_space<vmem>>, vector<32x128xbf16>
    tpu.vector_store %arg4[%c0_5, %c0_6], %6 {strides = array<i32>} : memref<32x128xbf16, #tpu.memory_space<vmem>>, vector<32x128xbf16>,
    return
  }
  func.func @transform_0(%arg0: i32) -> (i32, i32) {
    %c0_i32 = arith.constant 0 : i32
    %c0_i32_0 = arith.constant 0 : i32
    return %arg0, %c0_i32 : i32, i32
  }
  func.func @transform_1(%arg0: i32) -> (i32, i32) {
    %c0_i32 = arith.constant 0 : i32
    %c0_i32_0 = arith.constant 0 : i32
    %c0_i32_1 = arith.constant 0 : i32
    return %c0_i32, %c0_i32_0 : i32, i32
  }
  func.func @transform_2(%arg0: i32) -> (i32, i32) {
    %c0_i32 = arith.constant 0 : i32
    %c0_i32_0 = arith.constant 0 : i32
    %c0_i32_1 = arith.constant 0 : i32
    return %c0_i32, %c0_i32_0 : i32, i32
  }
  func.func @transform_3(%arg0: i32) -> (i32, i32) {
    %c0_i32 = arith.constant 0 : i32
    %c0_i32_0 = arith.constant 0 : i32
    return %arg0, %c0_i32 : i32, i32
  }
}

</mosaic_0001>

<llo_original>
// kernel: tpu_custom_call.1
$region0: #{tpu_custom_call.1}
  #allocation0 [shape = 'u32[]', space=smem, size = 0x4, offset = 0x4, fixed_abs, tag = 'smem constant byte address 0x4 - core index']
  #allocation1 [shape = 'u32[144,128]{1,0:T(1,128)}', space=vmem, size = 0x12000, scoped, tag = 'internal scratch']
  %s0 = inlined_call_operand.hbm [shape: bf16[32,128], index: 0, kind: input, shape index: {}]
  %s1 = inlined_call_operand.hbm [shape: bf16[128,128], index: 1, kind: input, shape index: {}]
  %s2 = inlined_call_operand.vmem [shape: f32[1,128], index: 2, kind: input, shape index: {}]
  %s3 = inlined_call_operand.hbm [shape: bf16[32,128], index: 3, kind: output, shape index: {}]
  %s4 = sld [smem:[#allocation0]]
  $region30: #{tpu_custom_call.1} parent=0
    _
  %s6 = ssub.s32 1, %s4
  %s7 = scalar_select 0, %s6, %s4
  $region1: #{tpu_custom_call.1} parent=0
    #allocation2 [shape = 'u8[8192]{0}', space=vmem, size = 0x2000, scoped, tag = 'input window, operand 0, single buffered']
    #allocation3 [shape = 's32[1]{0}', space=sflag, size = 0x4, scoped, tag = 'scoped memory for tpu_custom_call.1']
    #allocation4 [shape = 's32[1]{0}', space=sflag, size = 0x4, scoped, tag = 'scoped memory for tpu_custom_call.1']
    #allocation5 [shape = 'u8[32768]{0}', space=vmem, size = 0x8000, scoped, tag = 'input window, operand 1, single buffered']
    #allocation6 [shape = 's32[1]{0}', space=sflag, size = 0x4, scoped, tag = 'scoped memory for tpu_custom_call.1']
    #allocation7 [shape = 'u8[8192]{0}', space=vmem, size = 0x2000, scoped, tag = 'output window, operand 0, single buffered']
    %8 = vsyncpa [#allocation3], 0
    %9 = vsyncpa [#allocation6], 0
    %10 = vsyncpa [#allocation4], 0
    // Predicated region
    $region2: #{tpu_custom_call.1} parent=1 // pred_check
      _
    $region3: #{tpu_custom_call.1} parent=1 // pred_check_branch
      %12 = sbr.rel (0) target = $region5
    $region4: #{tpu_custom_call.1} parent=1 // pred_region
      %s14 = ssub.s32 256, 256
      %15 = vsyncadd [#allocation3], %s14
      %s16 = sshll.u32 [#allocation2], 4
      %s17 = int_to_ptr.vmem [resolvable:$true] %s16
      %22 = dma.hbm_to_vmem [thread:$0]  %s0, 256, %s17, [#allocation3], 64, 64, 4
    $region5: #{tpu_custom_call.1} parent=1 // pred_fallthru
      _
    // Predicated region
    $region6: #{tpu_custom_call.1} parent=1 // pred_check
      _
    $region7: #{tpu_custom_call.1} parent=1 // pred_check_branch
      %24 = sbr.rel (0) target = $region9
    $region8: #{tpu_custom_call.1} parent=1 // pred_region
      %s26 = ssub.s32 1024, 1024
      %27 = vsyncadd [#allocation6], %s26
      %s28 = sshll.u32 [#allocation5], 4
      %s29 = int_to_ptr.vmem [resolvable:$true] %s28
      %34 = dma.hbm_to_vmem [thread:$0]  %s1, 1024, %s29, [#allocation6], 64, 64, 4
    $region9: #{tpu_custom_call.1} parent=1 // pred_fallthru
      _
    // Predicated region
    $region10: #{tpu_custom_call.1} parent=1 // pred_check
      _
    $region11: #{tpu_custom_call.1} parent=1 // pred_check_branch
      %36 = sbr.rel (0) target = $region13
    $region12: #{tpu_custom_call.1} parent=1 // pred_region
      _
    $region13: #{tpu_custom_call.1} parent=1 // pred_fallthru
      _
    // Predicated region
    $region14: #{tpu_custom_call.1} parent=1 // pred_check
      _
    $region15: #{tpu_custom_call.1} parent=1 // pred_check_branch
      %38 = sbr.rel (0) target = $region17
    $region16: #{tpu_custom_call.1} parent=1 // pred_region
      %39 = dma.done [#allocation3], 256
    $region17: #{tpu_custom_call.1} parent=1 // pred_fallthru
      _
    // Predicated region
    $region18: #{tpu_custom_call.1} parent=1 // pred_check
      _
    $region19: #{tpu_custom_call.1} parent=1 // pred_check_branch
      %41 = sbr.rel (0) target = $region21
    $region20: #{tpu_custom_call.1} parent=1 // pred_region
      %42 = dma.done [#allocation6], 1024
    $region21: #{tpu_custom_call.1} parent=1 // pred_fallthru
      _
    %v44 = vld [vmem:[#allocation2] sm:$0xf]
    %v45 = vld [vmem:[#allocation2 + $0x4] sm:$0xf]
    %v46 = vld [vmem:[#allocation2 + $0x8] sm:$0xf]
    %v47 = vld [vmem:[#allocation2 + $0xc] sm:$0xf]
    %v48 = vld [vmem:[#allocation5] sm:$0xf]
    %v49 = vld [vmem:[#allocation5 + $0x4] sm:$0xf]
    %v50 = vld [vmem:[#allocation5 + $0x8] sm:$0xf]
    %v51 = vld [vmem:[#allocation5 + $0xc] sm:$0xf]
    %v52 = vld [vmem:[#allocation5 + $0x10] sm:$0xf]
    %v53 = vld [vmem:[#allocation5 + $0x14] sm:$0xf]
    %v54 = vld [vmem:[#allocation5 + $0x18] sm:$0xf]
    %v55 = vld [vmem:[#allocation5 + $0x1c] sm:$0xf]
    %v56 = vld [vmem:[#allocation5 + $0x20] sm:$0xf]
    %v57 = vld [vmem:[#allocation5 + $0x24] sm:$0xf]
    %v58 = vld [vmem:[#allocation5 + $0x28] sm:$0xf]
    %v59 = vld [vmem:[#allocation5 + $0x2c] sm:$0xf]
    %v60 = vld [vmem:[#allocation5 + $0x30] sm:$0xf]
    %v61 = vld [vmem:[#allocation5 + $0x34] sm:$0xf]
    %v62 = vld [vmem:[#allocation5 + $0x38] sm:$0xf]
    %v63 = vld [vmem:[#allocation5 + $0x3c] sm:$0xf]
    %v64 = vld [vmem:[%s2] sm:$0x1]
    %v66 = vlaneseq
    %v67 = vshrl.u32 %v66, 7
    %v68 = vsub.s32 0, %v67
    %v69 = vrot.slane %v64, %v68
    %v75 = vunpack.c.l.b16 %v44
    %v76 = vunpack.c.l.b16 %v45
    %v77 = vunpack.c.l.b16 %v46
    %v78 = vunpack.c.l.b16 %v47
    %v79 = vpack.c.b16 %v76, %v75
    %v80 = vpack.c.b16 %v78, %v77
    %v99 = vunpack.c.l.b16 %v48
    %v100 = vunpack.c.l.b16 %v49
    %v101 = vunpack.c.l.b16 %v50
    %v102 = vunpack.c.l.b16 %v51
    %v103 = vunpack.c.l.b16 %v52
    %v104 = vunpack.c.l.b16 %v53
    %v105 = vunpack.c.l.b16 %v54
    %v106 = vunpack.c.l.b16 %v55
    %v107 = vunpack.c.l.b16 %v56
    %v108 = vunpack.c.l.b16 %v57
    %v109 = vunpack.c.l.b16 %v58
    %v110 = vunpack.c.l.b16 %v59
    %v111 = vunpack.c.l.b16 %v60
    %v112 = vunpack.c.l.b16 %v61
    %v113 = vunpack.c.l.b16 %v62
    %v114 = vunpack.c.l.b16 %v63
    %v115 = vpack.c.b16 %v100, %v99
    %v116 = vpack.c.b16 %v102, %v101
    %v117 = vpack.c.b16 %v104, %v103
    %v118 = vpack.c.b16 %v106, %v105
    %v119 = vpack.c.b16 %v108, %v107
    %v120 = vpack.c.b16 %v110, %v109
    %v121 = vpack.c.b16 %v112, %v111
    %v122 = vpack.c.b16 %v114, %v113
    %131 = vmatprep.subr.bf16.mxu0 0
    %132 = vmatpush1.bf16.msra.mxu0 %v115
    %133 = vmatprep.subr.bf16.mxu0 0
    %134 = vmatpush1.bf16.msra.mxu0 %v116
    %135 = vmatprep.subr.bf16.mxu0 0
    %136 = vmatpush1.bf16.msra.mxu0 %v117
    %137 = vmatprep.subr.bf16.mxu0 0
    %138 = vmatpush1.bf16.msra.mxu0 %v118
    %139 = vmatprep.subr.bf16.mxu0 0
    %140 = vmatpush1.bf16.msra.mxu0 %v119
    %141 = vmatprep.subr.bf16.mxu0 0
    %142 = vmatpush1.bf16.msra.mxu0 %v120
    %143 = vmatprep.subr.bf16.mxu0 0
    %144 = vmatpush1.bf16.msra.mxu0 %v121
    %145 = vmatprep.subr.bf16.mxu0 0
    %146 = vmatpush1.bf16.msra.mxu0 %v122
    %147 = vmatprep.subr.bf16.mxu0 0
    %148 = vmatpush1.bf16.msra.mxu0 0
    %149 = vmatprep.subr.bf16.mxu0 0
    %150 = vmatpush1.bf16.msra.mxu0 0
    %151 = vmatprep.subr.bf16.mxu0 0
    %152 = vmatpush1.bf16.msra.mxu0 0
    %153 = vmatprep.subr.bf16.mxu0 0
    %154 = vmatpush1.bf16.msra.mxu0 0
    %155 = vmatprep.subr.bf16.mxu0 0
    %156 = vmatpush1.bf16.msra.mxu0 0
    %157 = vmatprep.subr.bf16.mxu0 0
    %158 = vmatpush1.bf16.msra.mxu0 0
    %159 = vmatprep.subr.bf16.mxu0 0
    %160 = vmatpush1.bf16.msra.mxu0 0
    %161 = vmatprep.subr.bf16.mxu0 0
    %162 = vmatpush1.bf16.msra.mxu0 0
    %163 = vmatprep.mubr.bf16.mxu0 0
    %164 = vmatmul.mubr.bf16.gmra.mrb[0].mxu0 %v79
    %v165 = vpop.f32.mrb[0].mxu0
    %v166 = vadd.f32 %v69, %v165
    %v167 = vpop.f32.mrb[0].mxu0
    %v168 = vpop.f32.mrb[0].mxu0
    %v169 = vadd.f32 %v69, %v168
    %v170 = vpop.f32.mrb[0].mxu0
    %171 = vmatprep.mubr.bf16.mxu0 0
    %172 = vmatmul.mubr.bf16.gmra.mrb[0].mxu0 %v80
    %v173 = vpop.f32.mrb[0].mxu0
    %v174 = vadd.f32 %v69, %v173
    %v175 = vpop.f32.mrb[0].mxu0
    %v176 = vpop.f32.mrb[0].mxu0
    %v177 = vadd.f32 %v69, %v176
    %v178 = vpop.f32.mrb[0].mxu0
    %179 = vdwg.mxu0
    %v180 = vpack.c.bf16 %v169, %v166
    %v181 = vpack.c.bf16 %v177, %v174
    %v184 = vunpack.c.l.b16 %v180
    %v185 = vunpack.c.h.b16 %v180
    %v186 = vunpack.c.l.b16 %v181
    %v187 = vunpack.c.h.b16 %v181
    %v188 = vpack.c.b16 %v184, %v184
    %v189 = vpack.c.b16 %v185, %v185
    %v190 = vpack.c.b16 %v186, %v186
    %v191 = vpack.c.b16 %v187, %v187
    %196 = vst [vmem:[#allocation7] sm:$0xf] %v188
    %197 = vst [vmem:[#allocation7 + $0x4] sm:$0xf] %v189
    %198 = vst [vmem:[#allocation7 + $0x8] sm:$0xf] %v190
    %199 = vst [vmem:[#allocation7 + $0xc] sm:$0xf] %v191
    // Predicated region
    $region22: #{tpu_custom_call.1} parent=1 // pred_check
      _
    $region23: #{tpu_custom_call.1} parent=1 // pred_check_branch
      %201 = sbr.rel (0) target = $region25
    $region24: #{tpu_custom_call.1} parent=1 // pred_region
      %s203 = ssub.s32 256, 256
      %204 = vsyncadd [#allocation4], %s203
      %s205 = sshll.u32 [#allocation7], 4
      %s206 = int_to_ptr.vmem [resolvable:$true] %s205
      %211 = dma.vmem_to_hbm [thread:$0]  %s206, 256, %s3, [#allocation4], 64, 64, 4
    $region25: #{tpu_custom_call.1} parent=1 // pred_fallthru
      _
    // Predicated region
    $region26: #{tpu_custom_call.1} parent=1 // pred_check
      _
    $region27: #{tpu_custom_call.1} parent=1 // pred_check_branch
      %213 = sbr.rel (0) target = $region29
    $region28: #{tpu_custom_call.1} parent=1 // pred_region
      %214 = dma.done [#allocation4], 256
    $region29: #{tpu_custom_call.1} parent=1 // pred_fallthru
      _
    %215 = vsyncpa [#allocation3], 1
    %216 = vsyncpa [#allocation6], 1
    %217 = vsyncpa [#allocation4], 1

</llo_original>
